<compile_context>
chip_gen: v7x
topology: tpu7x:2x2x1
jax: 0.10.0
libtpu: 0.0.40
codegen_flags: <defaults>
</compile_context>

<pallas_src>
import jax
import jax.numpy as jnp
from jax.experimental import pallas as pl
from jax.experimental.pallas import tpu as pltpu


# ------------------------------- configuration -------------------------------
B = 2              # batch (environments)
IMG = 16           # spatial size of the (small) synthetic observations
DEPTH_C, RGB_C = 1, 3
DEPTH_OUT = 32     # DEPTH_ENCODER.output_size
RGB_OUT = 32       # RGB_ENCODER.output_size
EMB = 32           # gps / compass / objectgoal / prev-action embedding dims
N_OBJ_CAT = 6      # objectgoal categories
NUM_ACTIONS = 4    # action_space.n
HIDDEN = 32        # STATE_ENCODER.hidden_size (1 recurrent GRU layer)
GPS_DIM = 2
RNN_INPUT = DEPTH_OUT + RGB_OUT + 4 * EMB  # 192

# lane layout of the packed raw-observation vector
D_OFF, D_LEN = 0, DEPTH_C * IMG * IMG           # 0..256
R_OFF, R_LEN = 256, RGB_C * IMG * IMG           # 256..1024
G_OFF = 1024                                    # gps (2)
C_OFF = 1026                                    # [cos, sin] (2)
O_OFF = 1028                                    # objectgoal one-hot (6)
A_OFF = 1034                                    # prev-action one-hot (5)
BIAS_OFF = 1039                                 # constant 1.0 (folds GRU biases)
FEAT_W = 1040

GATE_W = 4 * HIDDEN                             # [a_r | a_z | gi_n | gh_n] = 128


# --------------------------------- kernel ------------------------------------
def seq2seq_kernel(feats_ref, h_ref, wx_ref, wh_ref, wact_ref, bact_ref, out_ref):
    f32 = jnp.float32
    H = HIDDEN

    h_old = h_ref[...]                                    # [B, 32] f32 (mask-gated)

    # encoders + W_ih + ALL GRU biases (constant-1 lane) in ONE bf16 MXU matmul;
    # gates packed densely into one 128-lane group: [a_r | a_z | gi_n | gh_n].
    pre = jnp.dot(feats_ref[...].astype(jnp.bfloat16), wx_ref[...],
                  preferred_element_type=f32)             # [B, 128]
    # recurrent W_hh*h contribution kept in f32 (tiny 32x128 matmul)
    pre = pre + jnp.dot(h_old, wh_ref[...], preferred_element_type=f32)

    a_r = pre[:, 0 * H:1 * H]
    a_z = pre[:, 1 * H:2 * H]
    gi_n = pre[:, 2 * H:3 * H]
    gh_n = pre[:, 3 * H:4 * H]

    r = jax.nn.sigmoid(a_r)
    z = jax.nn.sigmoid(a_z)
    n = jnp.tanh(gi_n + r * gh_n)
    h_new = (1.0 - z) * n + z * h_old                     # [B, 32] f32

    # CategoricalNet head: bf16 MXU, f32 accum; pad lanes carry -1e30 bias so
    # the 32-lane log-softmax is exact for the real NUM_ACTIONS lanes.
    logits = jnp.dot(h_new.astype(jnp.bfloat16), wact_ref[...],
                     preferred_element_type=f32) + bact_ref[...]   # [B, 32]
    m = jnp.max(logits, axis=-1, keepdims=True)
    lse = m + jnp.log(jnp.sum(jnp.exp(logits - m), axis=-1, keepdims=True))

    out_ref[:, 0:H] = logits - lse
    out_ref[:, H:2 * H] = h_new


# --------------------------------- wrapper ------------------------------------
@jax.jit
def seq2seq_forward(packed, observations, rnn_hidden_states, prev_actions, masks):
    """observations: dict with 'depth' [B,1,H,W], 'rgb' [B,3,H,W], 'gps' [B,2],
    'compass' [B,1], 'objectgoal' [B,1] (int32).
    rnn_hidden_states: [1, B, HIDDEN]; prev_actions: [B,1] int32; masks: [B,1] f32.
    Returns (normalized_logits [B, NUM_ACTIONS], rnn_hidden_states [1, B, HIDDEN]).
    """
    f32 = jnp.float32
    depth_flat = observations["depth"].reshape(B, -1).astype(f32)
    rgb_flat = observations["rgb"].reshape(B, -1).astype(f32)
    gps = observations["gps"].astype(f32)
    comp = observations["compass"].astype(f32)
    comp_obs = jnp.concatenate([jnp.cos(comp), jnp.sin(comp)], axis=-1)   # [B, 2]

    obj_idx = observations["objectgoal"].reshape(-1).astype(jnp.int32)
    obj_oh = jax.nn.one_hot(obj_idx, N_OBJ_CAT, dtype=f32)                # [B, 6]

    # prev_action index: ((prev_actions.float() + 1) * masks).long().view(-1)
    masks_f = masks.astype(f32)
    pa_idx = ((prev_actions.astype(f32) + 1.0) * masks_f).astype(jnp.int32).reshape(-1)
    pa_oh = jax.nn.one_hot(pa_idx, NUM_ACTIONS + 1, dtype=f32)            # [B, 5]

    ones = jnp.ones((B, 1), f32)   # constant-1 lane: all GRU biases fold into w_x
    feats = jnp.concatenate(
        [depth_flat, rgb_flat, gps, comp_obs, obj_oh, pa_oh, ones], axis=-1)  # [B, 1040]

    # RNNStateEncoder mask-gates the hidden state before the GRU step
    h_masked = rnn_hidden_states.reshape(B, HIDDEN).astype(f32) * masks_f  # [B, 32]

    vmem = pl.BlockSpec(memory_space=pltpu.MemorySpace.VMEM)
    out = pl.pallas_call(
        seq2seq_kernel,
        out_shape=jax.ShapeDtypeStruct((B, 2 * HIDDEN), f32),
        in_specs=[vmem] * 6,
        out_specs=vmem,
    )(feats, h_masked, packed["w_x"], packed["w_h"], packed["w_act"], packed["b_act"])

    logits = out[:, 0:NUM_ACTIONS]
    h_new = out[:, HIDDEN:2 * HIDDEN].reshape(1, B, HIDDEN)
    return logits, h_new


# ----------------------------- deterministic init ------------------------------
def init_params(key):
    ks = jax.random.split(key, 16)
    n = lambda k, shape, scale: (scale * jax.random.normal(k, shape)).astype(jnp.float32)
    d_in = DEPTH_C * IMG * IMG
    r_in = RGB_C * IMG * IMG
    return {
        "w_depth":   n(ks[0], (d_in, DEPTH_OUT), 0.05),
        "b_depth":   jnp.zeros((1, DEPTH_OUT), jnp.float32),
        "w_rgb":     n(ks[1], (r_in, RGB_OUT), 0.05),
        "b_rgb":     jnp.zeros((1, RGB_OUT), jnp.float32),
        "w_gps":     n(ks[2], (GPS_DIM, EMB), 0.5),
        "b_gps":     n(ks[3], (1, EMB), 0.1),
        "w_compass": n(ks[4], (2, EMB), 0.5),
        "b_compass": n(ks[5], (1, EMB), 0.1),
        "emb_obj":   n(ks[6], (N_OBJ_CAT, EMB), 1.0),
        "emb_act":   n(ks[7], (NUM_ACTIONS + 1, EMB), 1.0),
        "w_ih":      n(ks[8], (RNN_INPUT, 3 * HIDDEN), 0.1),
        "b_ih":      n(ks[9], (1, 3 * HIDDEN), 0.1),
        "w_hh":      n(ks[10], (HIDDEN, 3 * HIDDEN), 0.1),
        "b_hh":      n(ks[11], (1, 3 * HIDDEN), 0.1),
        "w_action":  n(ks[12], (HIDDEN, NUM_ACTIONS), 0.5),
        "b_action":  n(ks[13], (1, NUM_ACTIONS), 0.1),
    }


def pack_params(p):
    """Fold the (linear) encoders / embedding tables / W_ih / all GRU biases
    into one dense [FEAT_W, 128] bf16 matrix (gates packed 4x32 into one
    128-lane group), keep W_hh as a small f32 [32,128] matrix (recurrent path
    precision), and pad the action head to a tiny [32,32] bf16 tile.
    Valid only while the depth/rgb encoders are linear stand-ins."""
    H = HIDDEN
    W_ih, b_ih = p["w_ih"], p["b_ih"][0]          # [192, 96], [96]
    W_hh, b_hh = p["w_hh"], p["b_hh"][0]          # [32, 96],  [96]

    # raw-feature -> [r|z|n] pre-activation rows (encoder weights folded in)
    W_x = jnp.zeros((FEAT_W, 3 * H), jnp.float32)
    b_x = b_ih
    enc = [
        (p["w_depth"],   p["b_depth"],   D_OFF,   0),
        (p["w_rgb"],     p["b_rgb"],     R_OFF,  32),
        (p["w_gps"],     p["b_gps"],     G_OFF,  64),
        (p["w_compass"], p["b_compass"], C_OFF,  96),
        (p["emb_obj"],   None,           O_OFF, 128),
        (p["emb_act"],   None,           A_OFF, 160),
    ]
    for W_e, b_e, off, xoff in enc:
        blk = W_ih[xoff:xoff + 32, :]                        # [32, 96]
        W_x = W_x.at[off:off + W_e.shape[0], :].set(W_e @ blk)
        if b_e is not None:
            b_x = b_x + b_e[0] @ blk

    # dense gate pack: one 128-lane group = [a_r | a_z | gi_n | gh_n], 32 each.
    # Feature lane BIAS_OFF is a constant 1.0, so the bias row carries all biases.
    w_x = jnp.zeros((FEAT_W, GATE_W), jnp.float32)
    w_x = w_x.at[:, 0 * H:1 * H].set(W_x[:, 0 * H:1 * H])    # a_r (x part)
    w_x = w_x.at[:, 1 * H:2 * H].set(W_x[:, 1 * H:2 * H])    # a_z (x part)
    w_x = w_x.at[:, 2 * H:3 * H].set(W_x[:, 2 * H:3 * H])    # gi_n
    bias_row = jnp.concatenate([
        b_x[0 * H:1 * H] + b_hh[0 * H:1 * H],                # a_r bias (ih + hh)
        b_x[1 * H:2 * H] + b_hh[1 * H:2 * H],                # a_z bias (ih + hh)
        b_x[2 * H:3 * H],                                    # gi_n bias (ih)
        b_hh[2 * H:3 * H],                                    # gh_n bias (hh)
    ])
    w_x = w_x.at[BIAS_OFF, :].set(bias_row)

    # recurrent weights, same dense gate layout, kept in f32
    w_h = jnp.zeros((H, GATE_W), jnp.float32)
    w_h = w_h.at[:, 0 * H:1 * H].set(W_hh[:, 0 * H:1 * H])   # a_r (h part)
    w_h = w_h.at[:, 1 * H:2 * H].set(W_hh[:, 1 * H:2 * H])   # a_z (h part)
    w_h = w_h.at[:, 3 * H:4 * H].set(W_hh[:, 2 * H:3 * H])   # gh_n

    # action head padded to [32, 32]; pad-lane bias = -1e30 so the 32-lane
    # log-softmax in the kernel is exact for the real NUM_ACTIONS lanes
    w_act = jnp.zeros((H, H), jnp.float32).at[:, 0:NUM_ACTIONS].set(p["w_action"])
    b_act = jnp.full((1, H), -1e30, jnp.float32).at[0, 0:NUM_ACTIONS].set(p["b_action"][0])

    return {"w_x": w_x.astype(jnp.bfloat16),     # ~266 KB
            "w_h": w_h,                          # f32, 16 KB (recurrent precision)
            "w_act": w_act.astype(jnp.bfloat16), # 2 KB
            "b_act": b_act}                      # 128 B


# ----------------------------- pure-JAX reference ------------------------------
def reference_forward(p, observations, rnn_hidden_states, prev_actions, masks):
    f32 = jnp.float32
    H = HIDDEN
    depth = observations["depth"].reshape(B, -1).astype(f32)
    rgb = observations["rgb"].reshape(B, -1).astype(f32)
    gps = observations["gps"].astype(f32)
    comp = observations["compass"].astype(f32)
    comp_obs = jnp.concatenate([jnp.cos(comp), jnp.sin(comp)], axis=-1)
    obj_idx = observations["objectgoal"].reshape(-1).astype(jnp.int32)
    masks_f = masks.astype(f32)
    pa_idx = ((prev_actions.astype(f32) + 1.0) * masks_f).astype(jnp.int32).reshape(-1)

    d = depth @ p["w_depth"] + p["b_depth"]
    rg = rgb @ p["w_rgb"] + p["b_rgb"]
    g = gps @ p["w_gps"] + p["b_gps"]
    c = comp_obs @ p["w_compass"] + p["b_compass"]
    o = p["emb_obj"][obj_idx]
    a = p["emb_act"][pa_idx]
    x = jnp.concatenate([d, rg, g, c, o, a], axis=-1)          # [B, 192]

    h = rnn_hidden_states.reshape(B, H).astype(f32) * masks_f
    gi = x @ p["w_ih"] + p["b_ih"]
    gh = h @ p["w_hh"] + p["b_hh"]
    r = jax.nn.sigmoid(gi[:, 0:H] + gh[:, 0:H])
    z = jax.nn.sigmoid(gi[:, H:2 * H] + gh[:, H:2 * H])
    n = jnp.tanh(gi[:, 2 * H:3 * H] + r * gh[:, 2 * H:3 * H])
    h_new = (1.0 - z) * n + z * h

    logits = jax.nn.log_softmax(h_new @ p["w_action"] + p["b_action"], axis=-1)
    return logits, h_new.reshape(1, B, H)


# ------------------------------------ main -------------------------------------
if __name__ == "__main__":
    key = jax.random.PRNGKey(0)
    kp, kd, kr, kg, kc, ko, kh, ka = jax.random.split(key, 8)

    params = init_params(kp)
    packed = pack_params(params)

    observations = {
        "depth": jax.random.uniform(kd, (B, DEPTH_C, IMG, IMG), jnp.float32),
        "rgb": jax.random.uniform(kr, (B, RGB_C, IMG, IMG), jnp.float32),
        "gps": jax.random.normal(kg, (B, GPS_DIM), jnp.float32),
        "compass": jax.random.uniform(kc, (B, 1), jnp.float32,
                                      minval=-3.14159, maxval=3.14159),
        "objectgoal": jax.random.randint(ko, (B, 1), 0, N_OBJ_CAT, jnp.int32),
    }
    rnn_hidden_states = jax.random.normal(kh, (1, B, HIDDEN), jnp.float32)
    prev_actions = jax.random.randint(ka, (B, 1), 0, NUM_ACTIONS, jnp.int32)
    masks = jnp.ones((B, 1), jnp.float32)

    logits, h_new = seq2seq_forward(
        packed, observations, rnn_hidden_states, prev_actions, masks)
    jax.block_until_ready((logits, h_new))

    assert logits.shape == (B, NUM_ACTIONS)
    assert h_new.shape == (1, B, HIDDEN)
    assert bool(jnp.all(jnp.isfinite(logits)))
    assert bool(jnp.all(jnp.isfinite(h_new)))

    # pure-f32 unfused reference (bf16 matmul + init-time folding tolerance)
    ref_logits, ref_h = reference_forward(
        params, observations, rnn_hidden_states, prev_actions, masks)
    assert bool(jnp.allclose(logits, ref_logits, atol=1e-1))
    assert bool(jnp.allclose(h_new, ref_h, atol=1e-1))

    print("KERNEL_OK")
</pallas_src>

<mosaic_0001>
module attributes {stable_mosaic.version = 11 : i64} {
  func.func @seq2seq_kernel(%arg0: memref<2x1040xf32, #tpu.memory_space<vmem>>, %arg1: memref<2x32xf32, #tpu.memory_space<vmem>>, %arg2: memref<1040x128xbf16, #tpu.memory_space<vmem>>, %arg3: memref<32x128xf32, #tpu.memory_space<vmem>>, %arg4: memref<32x32xbf16, #tpu.memory_space<vmem>>, %arg5: memref<1x32xf32, #tpu.memory_space<vmem>>, %arg6: memref<2x64xf32, #tpu.memory_space<vmem>>) attributes {dimension_semantics = [], scalar_prefetch = 0 : i64, scratch_operands = 0 : i64, tpu.core_type = #tpu.core_type<tc>} {
    %c0 = arith.constant 0 : index
    %c0_0 = arith.constant 0 : index
    %0 = vector.load %arg1[%c0, %c0_0] : memref<2x32xf32, #tpu.memory_space<vmem>>, vector<2x32xf32>
    %c0_1 = arith.constant 0 : index
    %c0_2 = arith.constant 0 : index
    %1 = vector.load %arg0[%c0_1, %c0_2] : memref<2x1040xf32, #tpu.memory_space<vmem>>, vector<2x1040xf32>
    %2 = arith.truncf %1 : vector<2x1040xf32> to vector<2x1040xbf16>
    %c0_3 = arith.constant 0 : index
    %c0_4 = arith.constant 0 : index
    %3 = vector.load %arg2[%c0_3, %c0_4] : memref<1040x128xbf16, #tpu.memory_space<vmem>>, vector<1040x128xbf16>
    %cst = arith.constant dense<0.000000e+00> : vector<2x128xf32>
    %4 = tpu.matmul %2, %3, %cst {dimension_numbers = #tpu.dot_dimension_numbers<[1], [0], [0], [1], [0, 0, 1, 1], [], []>} : vector<2x1040xbf16>, vector<1040x128xbf16>, vector<2x128xf32> -> vector<2x128xf32>
    %c0_5 = arith.constant 0 : index
    %c0_6 = arith.constant 0 : index
    %5 = vector.load %arg3[%c0_5, %c0_6] : memref<32x128xf32, #tpu.memory_space<vmem>>, vector<32x128xf32>
    %cst_7 = arith.constant dense<0.000000e+00> : vector<2x128xf32>
    %6 = tpu.matmul %0, %5, %cst_7 {dimension_numbers = #tpu.dot_dimension_numbers<[1], [0], [0], [1], [0, 0, 1, 1], [], []>} : vector<2x32xf32>, vector<32x128xf32>, vector<2x128xf32> -> vector<2x128xf32>
    %7 = arith.addf %4, %6 : vector<2x128xf32>
    %8 = vector.extract_strided_slice %7 {offsets = [0, 0], sizes = [2, 32], strides = [1, 1]} : vector<2x128xf32> to vector<2x32xf32>
    %9 = vector.extract_strided_slice %7 {offsets = [0, 32], sizes = [2, 32], strides = [1, 1]} : vector<2x128xf32> to vector<2x32xf32>
    %10 = vector.extract_strided_slice %7 {offsets = [0, 64], sizes = [2, 32], strides = [1, 1]} : vector<2x128xf32> to vector<2x32xf32>
    %11 = vector.extract_strided_slice %7 {offsets = [0, 96], sizes = [2, 32], strides = [1, 1]} : vector<2x128xf32> to vector<2x32xf32>
    %12 = arith.negf %8 : vector<2x32xf32>
    %13 = math.exp %12 : vector<2x32xf32>
    %cst_8 = arith.constant 1.000000e+00 : f32
    %14 = vector.broadcast %cst_8 : f32 to vector<2x32xf32>
    %15 = arith.addf %14, %13 : vector<2x32xf32>
    %16 = arith.divf %14, %15 : vector<2x32xf32>
    %17 = arith.negf %9 : vector<2x32xf32>
    %18 = math.exp %17 : vector<2x32xf32>
    %cst_9 = arith.constant 1.000000e+00 : f32
    %19 = vector.broadcast %cst_9 : f32 to vector<2x32xf32>
    %20 = arith.addf %19, %18 : vector<2x32xf32>
    %21 = arith.divf %19, %20 : vector<2x32xf32>
    %22 = arith.mulf %16, %11 : vector<2x32xf32>
    %23 = arith.addf %10, %22 : vector<2x32xf32>
    %24 = math.tanh %23 : vector<2x32xf32>
    %cst_10 = arith.constant 1.000000e+00 : f32
    %25 = vector.broadcast %cst_10 : f32 to vector<2x32xf32>
    %26 = arith.subf %25, %21 : vector<2x32xf32>
    %27 = arith.mulf %26, %24 : vector<2x32xf32>
    %28 = arith.mulf %21, %0 : vector<2x32xf32>
    %29 = arith.addf %27, %28 : vector<2x32xf32>
    %30 = arith.truncf %29 : vector<2x32xf32> to vector<2x32xbf16>
    %c0_11 = arith.constant 0 : index
    %c0_12 = arith.constant 0 : index
    %31 = vector.load %arg4[%c0_11, %c0_12] : memref<32x32xbf16, #tpu.memory_space<vmem>>, vector<32x32xbf16>
    %cst_13 = arith.constant dense<0.000000e+00> : vector<2x32xf32>
    %32 = tpu.matmul %30, %31, %cst_13 {dimension_numbers = #tpu.dot_dimension_numbers<[1], [0], [0], [1], [0, 0, 1, 1], [], []>} : vector<2x32xbf16>, vector<32x32xbf16>, vector<2x32xf32> -> vector<2x32xf32>
    %c0_14 = arith.constant 0 : index
    %c0_15 = arith.constant 0 : index
    %33 = vector.load %arg5[%c0_14, %c0_15] : memref<1x32xf32, #tpu.memory_space<vmem>>, vector<1x32xf32>
    %34 = vector.broadcast %33 : vector<1x32xf32> to vector<2x32xf32>
    %35 = arith.addf %32, %34 : vector<2x32xf32>
    %cst_16 = arith.constant dense<0xFF800000> : vector<2xf32>
    %36 = vector.multi_reduction <maximumf>, %35, %cst_16 [1] : vector<2x32xf32> to vector<2xf32>
    %37 = vector.shape_cast %36 : vector<2xf32> to vector<2x1xf32>
    %38 = vector.broadcast %37 : vector<2x1xf32> to vector<2x32xf32>
    %39 = arith.subf %35, %38 : vector<2x32xf32>
    %40 = math.exp %39 : vector<2x32xf32>
    %cst_17 = arith.constant dense<0.000000e+00> : vector<2xf32>
    %41 = vector.multi_reduction <add>, %40, %cst_17 [1] : vector<2x32xf32> to vector<2xf32>
    %42 = vector.shape_cast %41 : vector<2xf32> to vector<2x1xf32>
    %43 = math.log %42 : vector<2x1xf32>
    %44 = arith.addf %37, %43 : vector<2x1xf32>
    %45 = vector.broadcast %44 : vector<2x1xf32> to vector<2x32xf32>
    %46 = arith.subf %35, %45 : vector<2x32xf32>
    %c0_18 = arith.constant 0 : index
    %c0_19 = arith.constant 0 : index
    %47 = vector.load %arg6[%c0_18, %c0_19] : memref<2x64xf32, #tpu.memory_space<vmem>>, vector<2x32xf32>
    tpu.vector_store %arg6[%c0_18, %c0_19], %46 {strides = array<i32>} : memref<2x64xf32, #tpu.memory_space<vmem>>, vector<2x32xf32>,
    %c0_20 = arith.constant 0 : index
    %c32 = arith.constant 32 : index
    %48 = vector.load %arg6[%c0_20, %c32] : memref<2x64xf32, #tpu.memory_space<vmem>>, vector<2x32xf32>
    tpu.vector_store %arg6[%c0_20, %c32], %29 {strides = array<i32>} : memref<2x64xf32, #tpu.memory_space<vmem>>, vector<2x32xf32>,
    return
  }
}

</mosaic_0001>

<llo_original>
// kernel: seq2seq_forward.1
$region0: #{seq2seq_forward.1}
  #allocation0 [shape = 'u32[]', space=smem, size = 0x4, offset = 0x4, fixed_abs, tag = 'smem constant byte address 0x4 - core index']
  #allocation1 [shape = 'u32[144,128]{1,0:T(1,128)}', space=vmem, size = 0x12000, scoped, tag = 'internal scratch']
  %s0 = inlined_call_operand.vmem [shape: f32[2,1040], index: 0, kind: input, shape index: {}]
  %s1 = inlined_call_operand.vmem [shape: f32[2,32], index: 1, kind: input, shape index: {}]
  %s2 = inlined_call_operand.hbm [shape: bf16[1040,128], index: 2, kind: input, shape index: {}]
  %s3 = inlined_call_operand.vmem [shape: f32[32,128], index: 3, kind: input, shape index: {}]
  %s4 = inlined_call_operand.vmem [shape: bf16[32,32], index: 4, kind: input, shape index: {}]
  %s5 = inlined_call_operand.vmem [shape: f32[1,32], index: 5, kind: input, shape index: {}]
  %s6 = inlined_call_operand.vmem [shape: f32[2,64], index: 6, kind: output, shape index: {}]
  %s7 = sld [smem:[#allocation0]]
  $region38: #{seq2seq_forward.1} parent=0
    _
  %s9 = ssub.s32 1, %s7
  %s10 = scalar_select 0, %s9, %s7
  $region1: #{seq2seq_forward.1} parent=0
    #allocation2 [shape = 'u8[266240]{0}', space=vmem, size = 0x41000, scoped, tag = 'input window, operand 2, single buffered']
    #allocation3 [shape = 's32[1]{0}', space=sflag, size = 0x4, scoped, tag = 'scoped memory for seq2seq_forward.1']
    %11 = vsyncpa [#allocation3], 0
    // Predicated region
    $region2: #{seq2seq_forward.1} parent=1 // pred_check
      _
    $region3: #{seq2seq_forward.1} parent=1 // pred_check_branch
      %13 = sbr.rel (0) target = $region5
    $region4: #{seq2seq_forward.1} parent=1 // pred_region
      _
    $region5: #{seq2seq_forward.1} parent=1 // pred_fallthru
      _
    // Predicated region
    $region6: #{seq2seq_forward.1} parent=1 // pred_check
      _
    $region7: #{seq2seq_forward.1} parent=1 // pred_check_branch
      %15 = sbr.rel (0) target = $region9
    $region8: #{seq2seq_forward.1} parent=1 // pred_region
      _
    $region9: #{seq2seq_forward.1} parent=1 // pred_fallthru
      _
    // Predicated region
    $region10: #{seq2seq_forward.1} parent=1 // pred_check
      _
    $region11: #{seq2seq_forward.1} parent=1 // pred_check_branch
      %17 = sbr.rel (0) target = $region13
    $region12: #{seq2seq_forward.1} parent=1 // pred_region
      %s19 = ssub.s32 8320, 8320
      %20 = vsyncadd [#allocation3], %s19
      %s21 = sshll.u32 [#allocation2], 4
      %s22 = int_to_ptr.vmem [resolvable:$true] %s21
      %27 = dma.hbm_to_vmem [thread:$0]  %s2, 8320, %s22, [#allocation3], 64, 64, 4
    $region13: #{seq2seq_forward.1} parent=1 // pred_fallthru
      _
    // Predicated region
    $region14: #{seq2seq_forward.1} parent=1 // pred_check
      _
    $region15: #{seq2seq_forward.1} parent=1 // pred_check_branch
      %29 = sbr.rel (0) target = $region17
    $region16: #{seq2seq_forward.1} parent=1 // pred_region
      _
    $region17: #{seq2seq_forward.1} parent=1 // pred_fallthru
      _
    // Predicated region
    $region18: #{seq2seq_forward.1} parent=1 // pred_check
      _
    $region19: #{seq2seq_forward.1} parent=1 // pred_check_branch
      %31 = sbr.rel (0) target = $region21
    $region20: #{seq2seq_forward.1} parent=1 // pred_region
      _
    $region21: #{seq2seq_forward.1} parent=1 // pred_fallthru
      _
    // Predicated region
    $region22: #{seq2seq_forward.1} parent=1 // pred_check
      _
    $region23: #{seq2seq_forward.1} parent=1 // pred_check_branch
      %33 = sbr.rel (0) target = $region25
    $region24: #{seq2seq_forward.1} parent=1 // pred_region
      _
    $region25: #{seq2seq_forward.1} parent=1 // pred_fallthru
      _
    // Predicated region
    $region26: #{seq2seq_forward.1} parent=1 // pred_check
      _
    $region27: #{seq2seq_forward.1} parent=1 // pred_check_branch
      %35 = sbr.rel (0) target = $region29
    $region28: #{seq2seq_forward.1} parent=1 // pred_region
      %36 = dma.done [#allocation3], 8320
    $region29: #{seq2seq_forward.1} parent=1 // pred_fallthru
      _
    %v38 = vld [vmem:[%s1] sm:$0x3]
    %v39 = vld [vmem:[%s0] sm:$0xff]
    %v40 = vld [vmem:[%s0 + $0x8] sm:$0xff]
    %v41 = vld [vmem:[%s0 + $0x10] sm:$0x3]
    %v45 = vcombine.high %v39, %v39
    %v47 = vunpack.c.l.s4 1983009808
    %v48 = vunpack.c.0.s8 %v47
    %v49 = vlaneseq
    %v50 = vshrl.u32 %v49, 7
    %v51 = vsub.s32 %v48, %v50
    %v52 = vrot.slane %v39, %v51
    %v54 = vunpack.c.l.s4 1983009808
    %v55 = vunpack.c.0.s8 %v54
    %v56 = vlaneseq
    %v57 = vshrl.u32 %v56, 7
    %v58 = vsub.s32 %v55, %v57
    %v59 = vrot.slane %v45, %v58
    %v60 = vcombine.high %v52, %v52
    %v61 = vcombine.high %v59, %v59
    %v62 = vcombine.high %v40, %v40
    %v64 = vunpack.c.l.s4 1983009808
    %v65 = vunpack.c.0.s8 %v64
    %v66 = vlaneseq
    %v67 = vshrl.u32 %v66, 7
    %v68 = vsub.s32 %v65, %v67
    %v69 = vrot.slane %v40, %v68
    %v71 = vunpack.c.l.s4 1983009808
    %v72 = vunpack.c.0.s8 %v71
    %v73 = vlaneseq
    %v74 = vshrl.u32 %v73, 7
    %v75 = vsub.s32 %v72, %v74
    %v76 = vrot.slane %v62, %v75
    %v77 = vcombine.high %v69, %v69
    %v78 = vcombine.high %v76, %v76
    %v80 = vunpack.c.l.s4 1983009808
    %v81 = vunpack.c.0.s8 %v80
    %v82 = vlaneseq
    %v83 = vshrl.u32 %v82, 7
    %v84 = vsub.s32 %v81, %v83
    %v85 = vrot.slane %v41, %v84
    %v95 = vpack.c.bf16 %v52, %v52
    %v96 = vpack.c.bf16 %v60, %v60
    %v97 = vpack.c.bf16 %v59, %v59
    %v98 = vpack.c.bf16 %v61, %v61
    %v99 = vpack.c.bf16 %v69, %v69
    %v100 = vpack.c.bf16 %v77, %v77
    %v101 = vpack.c.bf16 %v76, %v76
    %v102 = vpack.c.bf16 %v78, %v78
    %v103 = vpack.c.bf16 %v85, %v85
    %v104 = vld [vmem:[#allocation2] sm:$0xf]
    %v105 = vld [vmem:[#allocation2 + $0x4] sm:$0xf]
    %v106 = vld [vmem:[#allocation2 + $0x8] sm:$0xf]
    %v107 = vld [vmem:[#allocation2 + $0xc] sm:$0xf]
    %v108 = vld [vmem:[#allocation2 + $0x10] sm:$0xf]
    %v109 = vld [vmem:[#allocation2 + $0x14] sm:$0xf]
    %v110 = vld [vmem:[#allocation2 + $0x18] sm:$0xf]
    %v111 = vld [vmem:[#allocation2 + $0x1c] sm:$0xf]
    %v112 = vld [vmem:[#allocation2 + $0x20] sm:$0xf]
    %v113 = vld [vmem:[#allocation2 + $0x24] sm:$0xf]
    %v114 = vld [vmem:[#allocation2 + $0x28] sm:$0xf]
    %v115 = vld [vmem:[#allocation2 + $0x2c] sm:$0xf]
    %v116 = vld [vmem:[#allocation2 + $0x30] sm:$0xf]
    %v117 = vld [vmem:[#allocation2 + $0x34] sm:$0xf]
    %v118 = vld [vmem:[#allocation2 + $0x38] sm:$0xf]
    %v119 = vld [vmem:[#allocation2 + $0x3c] sm:$0xf]
    %v120 = vld [vmem:[#allocation2 + $0x40] sm:$0xf]
    %v121 = vld [vmem:[#allocation2 + $0x44] sm:$0xf]
    %v122 = vld [vmem:[#allocation2 + $0x48] sm:$0xf]
    %v123 = vld [vmem:[#allocation2 + $0x4c] sm:$0xf]
    %v124 = vld [vmem:[#allocation2 + $0x50] sm:$0xf]
    %v125 = vld [vmem:[#allocation2 + $0x54] sm:$0xf]
    %v126 = vld [vmem:[#allocation2 + $0x58] sm:$0xf]
    %v127 = vld [vmem:[#allocation2 + $0x5c] sm:$0xf]
    %v128 = vld [vmem:[#allocation2 + $0x60] sm:$0xf]
    %v129 = vld [vmem:[#allocation2 + $0x64] sm:$0xf]
    %v130 = vld [vmem:[#allocation2 + $0x68] sm:$0xf]
    %v131 = vld [vmem:[#allocation2 + $0x6c] sm:$0xf]
    %v132 = vld [vmem:[#allocation2 + $0x70] sm:$0xf]
    %v133 = vld [vmem:[#allocation2 + $0x74] sm:$0xf]
    %v134 = vld [vmem:[#allocation2 + $0x78] sm:$0xf]
    %v135 = vld [vmem:[#allocation2 + $0x7c] sm:$0xf]
    %v136 = vld [vmem:[#allocation2 + $0x80] sm:$0xf]
    %v137 = vld [vmem:[#allocation2 + $0x84] sm:$0xf]
    %v138 = vld [vmem:[#allocation2 + $0x88] sm:$0xf]
    %v139 = vld [vmem:[#allocation2 + $0x8c] sm:$0xf]
    %v140 = vld [vmem:[#allocation2 + $0x90] sm:$0xf]
    %v141 = vld [vmem:[#allocation2 + $0x94] sm:$0xf]
    %v142 = vld [vmem:[#allocation2 + $0x98] sm:$0xf]
    %v143 = vld [vmem:[#allocation2 + $0x9c] sm:$0xf]
    %v144 = vld [vmem:[#allocation2 + $0xa0] sm:$0xf]
    %v145 = vld [vmem:[#allocation2 + $0xa4] sm:$0xf]
    %v146 = vld [vmem:[#allocation2 + $0xa8] sm:$0xf]
    %v147 = vld [vmem:[#allocation2 + $0xac] sm:$0xf]
    %v148 = vld [vmem:[#allocation2 + $0xb0] sm:$0xf]
    %v149 = vld [vmem:[#allocation2 + $0xb4] sm:$0xf]
    %v150 = vld [vmem:[#allocation2 + $0xb8] sm:$0xf]
    %v151 = vld [vmem:[#allocation2 + $0xbc] sm:$0xf]
    %v152 = vld [vmem:[#allocation2 + $0xc0] sm:$0xf]
    %v153 = vld [vmem:[#allocation2 + $0xc4] sm:$0xf]
    %v154 = vld [vmem:[#allocation2 + $0xc8] sm:$0xf]
    %v155 = vld [vmem:[#allocation2 + $0xcc] sm:$0xf]
    %v156 = vld [vmem:[#allocation2 + $0xd0] sm:$0xf]
    %v157 = vld [vmem:[#allocation2 + $0xd4] sm:$0xf]
    %v158 = vld [vmem:[#allocation2 + $0xd8] sm:$0xf]
    %v159 = vld [vmem:[#allocation2 + $0xdc] sm:$0xf]
    %v160 = vld [vmem:[#allocation2 + $0xe0] sm:$0xf]
    %v161 = vld [vmem:[#allocation2 + $0xe4] sm:$0xf]
    %v162 = vld [vmem:[#allocation2 + $0xe8] sm:$0xf]
    %v163 = vld [vmem:[#allocation2 + $0xec] sm:$0xf]
    %v164 = vld [vmem:[#allocation2 + $0xf0] sm:$0xf]
    %v165 = vld [vmem:[#allocation2 + $0xf4] sm:$0xf]
    %v166 = vld [vmem:[#allocation2 + $0xf8] sm:$0xf]
    %v167 = vld [vmem:[#allocation2 + $0xfc] sm:$0xf]
    %v168 = vld [vmem:[#allocation2 + $0x100] sm:$0xf]
    %v169 = vld [vmem:[#allocation2 + $0x104] sm:$0xf]
    %v170 = vld [vmem:[#allocation2 + $0x108] sm:$0xf]
    %v171 = vld [vmem:[#allocation2 + $0x10c] sm:$0xf]
    %v172 = vld [vmem:[#allocation2 + $0x110] sm:$0xf]
    %v173 = vld [vmem:[#allocation2 + $0x114] sm:$0xf]
    %v174 = vld [vmem:[#allocation2 + $0x118] sm:$0xf]
    %v175 = vld [vmem:[#allocation2 + $0x11c] sm:$0xf]
    %v176 = vld [vmem:[#allocation2 + $0x120] sm:$0xf]
    %v177 = vld [vmem:[#allocation2 + $0x124] sm:$0xf]
    %v178 = vld [vmem:[#allocation2 + $0x128] sm:$0xf]
    %v179 = vld [vmem:[#allocation2 + $0x12c] sm:$0xf]
    %v180 = vld [vmem:[#allocation2 + $0x130] sm:$0xf]
    %v181 = vld [vmem:[#allocation2 + $0x134] sm:$0xf]
    %v182 = vld [vmem:[#allocation2 + $0x138] sm:$0xf]
    %v183 = vld [vmem:[#allocation2 + $0x13c] sm:$0xf]
    %v184 = vld [vmem:[#allocation2 + $0x140] sm:$0xf]
    %v185 = vld [vmem:[#allocation2 + $0x144] sm:$0xf]
    %v186 = vld [vmem:[#allocation2 + $0x148] sm:$0xf]
    %v187 = vld [vmem:[#allocation2 + $0x14c] sm:$0xf]
    %v188 = vld [vmem:[#allocation2 + $0x150] sm:$0xf]
    %v189 = vld [vmem:[#allocation2 + $0x154] sm:$0xf]
    %v190 = vld [vmem:[#allocation2 + $0x158] sm:$0xf]
    %v191 = vld [vmem:[#allocation2 + $0x15c] sm:$0xf]
    %v192 = vld [vmem:[#allocation2 + $0x160] sm:$0xf]
    %v193 = vld [vmem:[#allocation2 + $0x164] sm:$0xf]
    %v194 = vld [vmem:[#allocation2 + $0x168] sm:$0xf]
    %v195 = vld [vmem:[#allocation2 + $0x16c] sm:$0xf]
    %v196 = vld [vmem:[#allocation2 + $0x170] sm:$0xf]
    %v197 = vld [vmem:[#allocation2 + $0x174] sm:$0xf]
    %v198 = vld [vmem:[#allocation2 + $0x178] sm:$0xf]
    %v199 = vld [vmem:[#allocation2 + $0x17c] sm:$0xf]
    %v200 = vld [vmem:[#allocation2 + $0x180] sm:$0xf]
    %v201 = vld [vmem:[#allocation2 + $0x184] sm:$0xf]
    %v202 = vld [vmem:[#allocation2 + $0x188] sm:$0xf]
    %v203 = vld [vmem:[#allocation2 + $0x18c] sm:$0xf]
    %v204 = vld [vmem:[#allocation2 + $0x190] sm:$0xf]
    %v205 = vld [vmem:[#allocation2 + $0x194] sm:$0xf]
    %v206 = vld [vmem:[#allocation2 + $0x198] sm:$0xf]
    %v207 = vld [vmem:[#allocation2 + $0x19c] sm:$0xf]
    %v208 = vld [vmem:[#allocation2 + $0x1a0] sm:$0xf]
    %v209 = vld [vmem:[#allocation2 + $0x1a4] sm:$0xf]
    %v210 = vld [vmem:[#allocation2 + $0x1a8] sm:$0xf]
    %v211 = vld [vmem:[#allocation2 + $0x1ac] sm:$0xf]
    %v212 = vld [vmem:[#allocation2 + $0x1b0] sm:$0xf]
    %v213 = vld [vmem:[#allocation2 + $0x1b4] sm:$0xf]
    %v214 = vld [vmem:[#allocation2 + $0x1b8] sm:$0xf]
    %v215 = vld [vmem:[#allocation2 + $0x1bc] sm:$0xf]
    %v216 = vld [vmem:[#allocation2 + $0x1c0] sm:$0xf]
    %v217 = vld [vmem:[#allocation2 + $0x1c4] sm:$0xf]
    %v218 = vld [vmem:[#allocation2 + $0x1c8] sm:$0xf]
    %v219 = vld [vmem:[#allocation2 + $0x1cc] sm:$0xf]
    %v220 = vld [vmem:[#allocation2 + $0x1d0] sm:$0xf]
    %v221 = vld [vmem:[#allocation2 + $0x1d4] sm:$0xf]
    %v222 = vld [vmem:[#allocation2 + $0x1d8] sm:$0xf]
    %v223 = vld [vmem:[#allocation2 + $0x1dc] sm:$0xf]
    %v224 = vld [vmem:[#allocation2 + $0x1e0] sm:$0xf]
    %v225 = vld [vmem:[#allocation2 + $0x1e4] sm:$0xf]
    %v226 = vld [vmem:[#allocation2 + $0x1e8] sm:$0xf]
    %v227 = vld [vmem:[#allocation2 + $0x1ec] sm:$0xf]
    %v228 = vld [vmem:[#allocation2 + $0x1f0] sm:$0xf]
    %v229 = vld [vmem:[#allocation2 + $0x1f4] sm:$0xf]
    %v230 = vld [vmem:[#allocation2 + $0x1f8] sm:$0xf]
    %v231 = vld [vmem:[#allocation2 + $0x1fc] sm:$0xf]
    %v232 = vld [vmem:[#allocation2 + $0x200] sm:$0xf]
    %v233 = vld [vmem:[#allocation2 + $0x204] sm:$0xf]
    %v234 = vld [vmem:[%s3] sm:$0xff]
    %v235 = vld [vmem:[%s3 + $0x8] sm:$0xff]
    %v236 = vld [vmem:[%s3 + $0x10] sm:$0xff]
    %v237 = vld [vmem:[%s3 + $0x18] sm:$0xff]
    %vm238 = vcmask 261120
    %v240 = vsel %vm238, %v38, 0
    %242 = vmatprep.subr.mxu0 0.0
    %243 = vmatpush1.msra.mxu0 %v234
    %244 = vmatprep.subr.mxu0 0.0
    %245 = vmatpush1.msra.mxu0 %v235
    %246 = vmatprep.subr.mxu0 0.0
    %247 = vmatpush1.msra.mxu0 %v236
    %248 = vmatprep.subr.mxu0 0.0
    %249 = vmatpush1.msra.mxu0 %v237
    %250 = vmatprep.subr.mxu0 0.0
    %251 = vmatpush1.msra.mxu0 0.0
    %252 = vmatprep.subr.mxu0 0.0
    %253 = vmatpush1.msra.mxu0 0.0
    %254 = vmatprep.subr.mxu0 0.0
    %255 = vmatpush1.msra.mxu0 0.0
    %256 = vmatprep.subr.mxu0 0.0
    %257 = vmatpush1.msra.mxu0 0.0
    %258 = vmatprep.subr.mxu0 0.0
    %259 = vmatpush1.msra.mxu0 0.0
    %260 = vmatprep.subr.mxu0 0.0
    %261 = vmatpush1.msra.mxu0 0.0
    %262 = vmatprep.subr.mxu0 0.0
    %263 = vmatpush1.msra.mxu0 0.0
    %264 = vmatprep.subr.mxu0 0.0
    %265 = vmatpush1.msra.mxu0 0.0
    %266 = vmatprep.subr.mxu0 0.0
    %267 = vmatpush1.msra.mxu0 0.0
    %268 = vmatprep.subr.mxu0 0.0
    %269 = vmatpush1.msra.mxu0 0.0
    %270 = vmatprep.subr.mxu0 0.0
    %271 = vmatpush1.msra.mxu0 0.0
    %272 = vmatprep.subr.mxu0 0.0
    %273 = vmatpush1.msra.mxu0 0.0
    %274 = vmatprep.subr.mxu0 0.0
    %275 = vmatpush1.msra.mxu0 0.0
    %276 = vmatprep.subr.mxu0 0.0
    %277 = vmatpush1.msra.mxu0 0.0
    %278 = vmatprep.subr.mxu0 0.0
    %279 = vmatpush1.msra.mxu0 0.0
    %280 = vmatprep.subr.mxu0 0.0
    %281 = vmatpush1.msra.mxu0 0.0
    %282 = vmatprep.subr.mxu0 0.0
    %283 = vmatpush1.msra.mxu0 0.0
    %284 = vmatprep.subr.mxu0 0.0
    %285 = vmatpush1.msra.mxu0 0.0
    %286 = vmatprep.subr.mxu0 0.0
    %287 = vmatpush1.msra.mxu0 0.0
    %288 = vmatprep.subr.mxu0 0.0
    %289 = vmatpush1.msra.mxu0 0.0
    %290 = vmatprep.subr.mxu0 0.0
    %291 = vmatpush1.msra.mxu0 0.0
    %292 = vmatprep.subr.mxu0 0.0
    %293 = vmatpush1.msra.mxu0 0.0
    %294 = vmatprep.subr.mxu0 0.0
    %295 = vmatpush1.msra.mxu0 0.0
    %296 = vmatprep.subr.mxu0 0.0
    %297 = vmatpush1.msra.mxu0 0.0
    %298 = vmatprep.subr.mxu0 0.0
    %299 = vmatpush1.msra.mxu0 0.0
    %300 = vmatprep.subr.mxu0 0.0
    %301 = vmatpush1.msra.mxu0 0.0
    %302 = vmatprep.subr.mxu0 0.0
    %303 = vmatpush1.msra.mxu0 0.0
    %304 = vmatprep.subr.mxu0 0.0
    %305 = vmatpush1.msra.mxu0 0.0
    %306 = vmatprep.mubr.f32.mxu0 0.0
    %307 = vmatmul.mubr.f32.gmra.mrb[0].mxu0 %v240
    %v308 = vpop.f32.mrb[0].mxu0
    %v309 = vadd.f32 0.0, %v308
    %v310 = vpop.f32.mrb[0].mxu0
    %311 = vdwg.mxu0
    %v442 = vunpack.c.l.b16 %v104
    %v443 = vunpack.c.l.b16 %v105
    %v444 = vunpack.c.l.b16 %v106
    %v445 = vunpack.c.l.b16 %v107
    %v446 = vunpack.c.l.b16 %v108
    %v447 = vunpack.c.l.b16 %v109
    %v448 = vunpack.c.l.b16 %v110
    %v449 = vunpack.c.l.b16 %v111
    %v450 = vunpack.c.l.b16 %v112
    %v451 = vunpack.c.l.b16 %v113
    %v452 = vunpack.c.l.b16 %v114
    %v453 = vunpack.c.l.b16 %v115
    %v454 = vunpack.c.l.b16 %v116
    %v455 = vunpack.c.l.b16 %v117
    %v456 = vunpack.c.l.b16 %v118
    %v457 = vunpack.c.l.b16 %v119
    %v458 = vunpack.c.l.b16 %v120
    %v459 = vunpack.c.l.b16 %v121
    %v460 = vunpack.c.l.b16 %v122
    %v461 = vunpack.c.l.b16 %v123
    %v462 = vunpack.c.l.b16 %v124
    %v463 = vunpack.c.l.b16 %v125
    %v464 = vunpack.c.l.b16 %v126
    %v465 = vunpack.c.l.b16 %v127
    %v466 = vunpack.c.l.b16 %v128
    %v467 = vunpack.c.l.b16 %v129
    %v468 = vunpack.c.l.b16 %v130
    %v469 = vunpack.c.l.b16 %v131
    %v470 = vunpack.c.l.b16 %v132
    %v471 = vunpack.c.l.b16 %v133
    %v472 = vunpack.c.l.b16 %v134
    %v473 = vunpack.c.l.b16 %v135
    %v474 = vunpack.c.l.b16 %v136
    %v475 = vunpack.c.l.b16 %v137
    %v476 = vunpack.c.l.b16 %v138
    %v477 = vunpack.c.l.b16 %v139
    %v478 = vunpack.c.l.b16 %v140
    %v479 = vunpack.c.l.b16 %v141
    %v480 = vunpack.c.l.b16 %v142
    %v481 = vunpack.c.l.b16 %v143
    %v482 = vunpack.c.l.b16 %v144
    %v483 = vunpack.c.l.b16 %v145
    %v484 = vunpack.c.l.b16 %v146
    %v485 = vunpack.c.l.b16 %v147
    %v486 = vunpack.c.l.b16 %v148
    %v487 = vunpack.c.l.b16 %v149
    %v488 = vunpack.c.l.b16 %v150
    %v489 = vunpack.c.l.b16 %v151
    %v490 = vunpack.c.l.b16 %v152
    %v491 = vunpack.c.l.b16 %v153
    %v492 = vunpack.c.l.b16 %v154
    %v493 = vunpack.c.l.b16 %v155
    %v494 = vunpack.c.l.b16 %v156
    %v495 = vunpack.c.l.b16 %v157
    %v496 = vunpack.c.l.b16 %v158
    %v497 = vunpack.c.l.b16 %v159
    %v498 = vunpack.c.l.b16 %v160
    %v499 = vunpack.c.l.b16 %v161
    %v500 = vunpack.c.l.b16 %v162
    %v501 = vunpack.c.l.b16 %v163
    %v502 = vunpack.c.l.b16 %v164
    %v503 = vunpack.c.l.b16 %v165
    %v504 = vunpack.c.l.b16 %v166
    %v505 = vunpack.c.l.b16 %v167
    %v506 = vunpack.c.l.b16 %v168
    %v507 = vunpack.c.l.b16 %v169
    %v508 = vunpack.c.l.b16 %v170
    %v509 = vunpack.c.l.b16 %v171
    %v510 = vunpack.c.l.b16 %v172
    %v511 = vunpack.c.l.b16 %v173
    %v512 = vunpack.c.l.b16 %v174
    %v513 = vunpack.c.l.b16 %v175
    %v514 = vunpack.c.l.b16 %v176
    %v515 = vunpack.c.l.b16 %v177
    %v516 = vunpack.c.l.b16 %v178
    %v517 = vunpack.c.l.b16 %v179
    %v518 = vunpack.c.l.b16 %v180
    %v519 = vunpack.c.l.b16 %v181
    %v520 = vunpack.c.l.b16 %v182
    %v521 = vunpack.c.l.b16 %v183
    %v522 = vunpack.c.l.b16 %v184
    %v523 = vunpack.c.l.b16 %v185
    %v524 = vunpack.c.l.b16 %v186
    %v525 = vunpack.c.l.b16 %v187
    %v526 = vunpack.c.l.b16 %v188
    %v527 = vunpack.c.l.b16 %v189
    %v528 = vunpack.c.l.b16 %v190
    %v529 = vunpack.c.l.b16 %v191
    %v530 = vunpack.c.l.b16 %v192
    %v531 = vunpack.c.l.b16 %v193
    %v532 = vunpack.c.l.b16 %v194
    %v533 = vunpack.c.l.b16 %v195
    %v534 = vunpack.c.l.b16 %v196
    %v535 = vunpack.c.l.b16 %v197
    %v536 = vunpack.c.l.b16 %v198
    %v537 = vunpack.c.l.b16 %v199
    %v538 = vunpack.c.l.b16 %v200
    %v539 = vunpack.c.l.b16 %v201
    %v540 = vunpack.c.l.b16 %v202
    %v541 = vunpack.c.l.b16 %v203
    %v542 = vunpack.c.l.b16 %v204
    %v543 = vunpack.c.l.b16 %v205
    %v544 = vunpack.c.l.b16 %v206
    %v545 = vunpack.c.l.b16 %v207
    %v546 = vunpack.c.l.b16 %v208
    %v547 = vunpack.c.l.b16 %v209
    %v548 = vunpack.c.l.b16 %v210
    %v549 = vunpack.c.l.b16 %v211
    %v550 = vunpack.c.l.b16 %v212
    %v551 = vunpack.c.l.b16 %v213
    %v552 = vunpack.c.l.b16 %v214
    %v553 = vunpack.c.l.b16 %v215
    %v554 = vunpack.c.l.b16 %v216
    %v555 = vunpack.c.l.b16 %v217
    %v556 = vunpack.c.l.b16 %v218
    %v557 = vunpack.c.l.b16 %v219
    %v558 = vunpack.c.l.b16 %v220
    %v559 = vunpack.c.l.b16 %v221
    %v560 = vunpack.c.l.b16 %v222
    %v561 = vunpack.c.l.b16 %v223
    %v562 = vunpack.c.l.b16 %v224
    %v563 = vunpack.c.l.b16 %v225
    %v564 = vunpack.c.l.b16 %v226
    %v565 = vunpack.c.l.b16 %v227
    %v566 = vunpack.c.l.b16 %v228
    %v567 = vunpack.c.l.b16 %v229
    %v568 = vunpack.c.l.b16 %v230
    %v569 = vunpack.c.l.b16 %v231
    %v570 = vunpack.c.l.b16 %v232
    %v571 = vunpack.c.l.b16 %v233
    %v572 = vpack.c.b16 %v443, %v442
    %v573 = vpack.c.b16 %v445, %v444
    %v574 = vpack.c.b16 %v447, %v446
    %v575 = vpack.c.b16 %v449, %v448
    %v576 = vpack.c.b16 %v451, %v450
    %v577 = vpack.c.b16 %v453, %v452
    %v578 = vpack.c.b16 %v455, %v454
    %v579 = vpack.c.b16 %v457, %v456
    %v580 = vpack.c.b16 %v459, %v458
    %v581 = vpack.c.b16 %v461, %v460
    %v582 = vpack.c.b16 %v463, %v462
    %v583 = vpack.c.b16 %v465, %v464
    %v584 = vpack.c.b16 %v467, %v466
    %v585 = vpack.c.b16 %v469, %v468
    %v586 = vpack.c.b16 %v471, %v470
    %v587 = vpack.c.b16 %v473, %v472
    %v588 = vpack.c.b16 %v475, %v474
    %v589 = vpack.c.b16 %v477, %v476
    %v590 = vpack.c.b16 %v479, %v478
    %v591 = vpack.c.b16 %v481, %v480
    %v592 = vpack.c.b16 %v483, %v482
    %v593 = vpack.c.b16 %v485, %v484
    %v594 = vpack.c.b16 %v487, %v486
    %v595 = vpack.c.b16 %v489, %v488
    %v596 = vpack.c.b16 %v491, %v490
    %v597 = vpack.c.b16 %v493, %v492
    %v598 = vpack.c.b16 %v495, %v494
    %v599 = vpack.c.b16 %v497, %v496
    %v600 = vpack.c.b16 %v499, %v498
    %v601 = vpack.c.b16 %v501, %v500
    %v602 = vpack.c.b16 %v503, %v502
    %v603 = vpack.c.b16 %v505, %v504
    %v604 = vpack.c.b16 %v507, %v506
    %v605 = vpack.c.b16 %v509, %v508
    %v606 = vpack.c.b16 %v511, %v510
    %v607 = vpack.c.b16 %v513, %v512
    %v608 = vpack.c.b16 %v515, %v514
    %v609 = vpack.c.b16 %v517, %v516
    %v610 = vpack.c.b16 %v519, %v518
    %v611 = vpack.c.b16 %v521, %v520
    %v612 = vpack.c.b16 %v523, %v522
    %v613 = vpack.c.b16 %v525, %v524
    %v614 = vpack.c.b16 %v527, %v526
    %v615 = vpack.c.b16 %v529, %v528
    %v616 = vpack.c.b16 %v531, %v530
    %v617 = vpack.c.b16 %v533, %v532
    %v618 = vpack.c.b16 %v535, %v534
    %v619 = vpack.c.b16 %v537, %v536
    %v620 = vpack.c.b16 %v539, %v538
    %v621 = vpack.c.b16 %v541, %v540
    %v622 = vpack.c.b16 %v543, %v542
    %v623 = vpack.c.b16 %v545, %v544
    %v624 = vpack.c.b16 %v547, %v546
    %v625 = vpack.c.b16 %v549, %v548
    %v626 = vpack.c.b16 %v551, %v550
    %v627 = vpack.c.b16 %v553, %v552
    %v628 = vpack.c.b16 %v555, %v554
    %v629 = vpack.c.b16 %v557, %v556
    %v630 = vpack.c.b16 %v559, %v558
    %v631 = vpack.c.b16 %v561, %v560
    %v632 = vpack.c.b16 %v563, %v562
    %v633 = vpack.c.b16 %v565, %v564
    %v634 = vpack.c.b16 %v567, %v566
    %v635 = vpack.c.b16 %v569, %v568
    %v636 = vpack.c.b16 %v571, %v570
    %vm702 = vcmask 130048
    %v704 = vsel %vm702, %v103, 0
    %706 = vmatprep.subr.bf16.mxu0 0
    %707 = vmatpush1.bf16.msra.mxu0 %v572
    %708 = vmatprep.subr.bf16.mxu0 0
    %709 = vmatpush1.bf16.msra.mxu0 %v573
    %710 = vmatprep.subr.bf16.mxu0 0
    %711 = vmatpush1.bf16.msra.mxu0 %v574
    %712 = vmatprep.subr.bf16.mxu0 0
    %713 = vmatpush1.bf16.msra.mxu0 %v575
    %714 = vmatprep.subr.bf16.mxu0 0
    %715 = vmatpush1.bf16.msra.mxu0 %v576
    %716 = vmatprep.subr.bf16.mxu0 0
    %717 = vmatpush1.bf16.msra.mxu0 %v577
    %718 = vmatprep.subr.bf16.mxu0 0
    %719 = vmatpush1.bf16.msra.mxu0 %v578
    %720 = vmatprep.subr.bf16.mxu0 0
    %721 = vmatpush1.bf16.msra.mxu0 %v579
    %722 = vmatprep.subr.bf16.mxu0 0
    %723 = vmatpush1.bf16.msra.mxu0 %v580
    %724 = vmatprep.subr.bf16.mxu0 0
    %725 = vmatpush1.bf16.msra.mxu0 %v581
    %726 = vmatprep.subr.bf16.mxu0 0
    %727 = vmatpush1.bf16.msra.mxu0 %v582
    %728 = vmatprep.subr.bf16.mxu0 0
    %729 = vmatpush1.bf16.msra.mxu0 %v583
    %730 = vmatprep.subr.bf16.mxu0 0
    %731 = vmatpush1.bf16.msra.mxu0 %v584
    %732 = vmatprep.subr.bf16.mxu0 0
    %733 = vmatpush1.bf16.msra.mxu0 %v585
    %734 = vmatprep.subr.bf16.mxu0 0
    %735 = vmatpush1.bf16.msra.mxu0 %v586
    %736 = vmatprep.subr.bf16.mxu0 0
    %737 = vmatpush1.bf16.msra.mxu0 %v587
    %738 = vmatprep.mubr.bf16.mxu0 %v96
    %739 = vmatmul.mubr.bf16.gmra.mrb[0].mxu0 %v95
    %v740 = vpop.f32.mrb[0].mxu0
    %v741 = vadd.f32 %v309, %v740
    %v742 = vpop.f32.mrb[0].mxu0
    %v743 = vpop.f32.mrb[0].mxu0
    %v744 = vpop.f32.mrb[0].mxu0
    %745 = vdwg.mxu0
    %746 = vmatprep.subr.bf16.mxu0 0
    %747 = vmatpush1.bf16.msra.mxu0 %v588
    %748 = vmatprep.subr.bf16.mxu0 0
    %749 = vmatpush1.bf16.msra.mxu0 %v589
    %750 = vmatprep.subr.bf16.mxu0 0
    %751 = vmatpush1.bf16.msra.mxu0 %v590
    %752 = vmatprep.subr.bf16.mxu0 0
    %753 = vmatpush1.bf16.msra.mxu0 %v591
    %754 = vmatprep.subr.bf16.mxu0 0
    %755 = vmatpush1.bf16.msra.mxu0 %v592
    %756 = vmatprep.subr.bf16.mxu0 0
    %757 = vmatpush1.bf16.msra.mxu0 %v593
    %758 = vmatprep.subr.bf16.mxu0 0
    %759 = vmatpush1.bf16.msra.mxu0 %v594
    %760 = vmatprep.subr.bf16.mxu0 0
    %761 = vmatpush1.bf16.msra.mxu0 %v595
    %762 = vmatprep.subr.bf16.mxu0 0
    %763 = vmatpush1.bf16.msra.mxu0 %v596
    %764 = vmatprep.subr.bf16.mxu0 0
    %765 = vmatpush1.bf16.msra.mxu0 %v597
    %766 = vmatprep.subr.bf16.mxu0 0
    %767 = vmatpush1.bf16.msra.mxu0 %v598
    %768 = vmatprep.subr.bf16.mxu0 0
    %769 = vmatpush1.bf16.msra.mxu0 %v599
    %770 = vmatprep.subr.bf16.mxu0 0
    %771 = vmatpush1.bf16.msra.mxu0 %v600
    %772 = vmatprep.subr.bf16.mxu0 0
    %773 = vmatpush1.bf16.msra.mxu0 %v601
    %774 = vmatprep.subr.bf16.mxu0 0
    %775 = vmatpush1.bf16.msra.mxu0 %v602
    %776 = vmatprep.subr.bf16.mxu0 0
    %777 = vmatpush1.bf16.msra.mxu0 %v603
    %778 = vmatprep.mubr.bf16.mxu0 %v98
    %779 = vmatmul.mubr.bf16.gmra.mrb[0].mxu0 %v97
    %v780 = vpop.f32.mrb[0].mxu0
    %v781 = vadd.f32 %v741, %v780
    %v782 = vpop.f32.mrb[0].mxu0
    %v783 = vpop.f32.mrb[0].mxu0
    %v784 = vpop.f32.mrb[0].mxu0
    %785 = vdwg.mxu0
    %786 = vmatprep.subr.bf16.mxu0 0
    %787 = vmatpush1.bf16.msra.mxu0 %v604
    %788 = vmatprep.subr.bf16.mxu0 0
    %789 = vmatpush1.bf16.msra.mxu0 %v605
    %790 = vmatprep.subr.bf16.mxu0 0
    %791 = vmatpush1.bf16.msra.mxu0 %v606
    %792 = vmatprep.subr.bf16.mxu0 0
    %793 = vmatpush1.bf16.msra.mxu0 %v607
    %794 = vmatprep.subr.bf16.mxu0 0
    %795 = vmatpush1.bf16.msra.mxu0 %v608
    %796 = vmatprep.subr.bf16.mxu0 0
    %797 = vmatpush1.bf16.msra.mxu0 %v609
    %798 = vmatprep.subr.bf16.mxu0 0
    %799 = vmatpush1.bf16.msra.mxu0 %v610
    %800 = vmatprep.subr.bf16.mxu0 0
    %801 = vmatpush1.bf16.msra.mxu0 %v611
    %802 = vmatprep.subr.bf16.mxu0 0
    %803 = vmatpush1.bf16.msra.mxu0 %v612
    %804 = vmatprep.subr.bf16.mxu0 0
    %805 = vmatpush1.bf16.msra.mxu0 %v613
    %806 = vmatprep.subr.bf16.mxu0 0
    %807 = vmatpush1.bf16.msra.mxu0 %v614
    %808 = vmatprep.subr.bf16.mxu0 0
    %809 = vmatpush1.bf16.msra.mxu0 %v615
    %810 = vmatprep.subr.bf16.mxu0 0
    %811 = vmatpush1.bf16.msra.mxu0 %v616
    %812 = vmatprep.subr.bf16.mxu0 0
    %813 = vmatpush1.bf16.msra.mxu0 %v617
    %814 = vmatprep.subr.bf16.mxu0 0
    %815 = vmatpush1.bf16.msra.mxu0 %v618
    %816 = vmatprep.subr.bf16.mxu0 0
    %817 = vmatpush1.bf16.msra.mxu0 %v619
    %818 = vmatprep.mubr.bf16.mxu0 %v100
    %819 = vmatmul.mubr.bf16.gmra.mrb[0].mxu0 %v99
    %v820 = vpop.f32.mrb[0].mxu0
    %v821 = vadd.f32 %v781, %v820
    %v822 = vpop.f32.mrb[0].mxu0
    %v823 = vpop.f32.mrb[0].mxu0
    %v824 = vpop.f32.mrb[0].mxu0
    %825 = vdwg.mxu0
    %826 = vmatprep.subr.bf16.mxu0 0
    %827 = vmatpush1.bf16.msra.mxu0 %v620
    %828 = vmatprep.subr.bf16.mxu0 0
    %829 = vmatpush1.bf16.msra.mxu0 %v621
    %830 = vmatprep.subr.bf16.mxu0 0
    %831 = vmatpush1.bf16.msra.mxu0 %v622
    %832 = vmatprep.subr.bf16.mxu0 0
    %833 = vmatpush1.bf16.msra.mxu0 %v623
    %834 = vmatprep.subr.bf16.mxu0 0
    %835 = vmatpush1.bf16.msra.mxu0 %v624
    %836 = vmatprep.subr.bf16.mxu0 0
    %837 = vmatpush1.bf16.msra.mxu0 %v625
    %838 = vmatprep.subr.bf16.mxu0 0
    %839 = vmatpush1.bf16.msra.mxu0 %v626
    %840 = vmatprep.subr.bf16.mxu0 0
    %841 = vmatpush1.bf16.msra.mxu0 %v627
    %842 = vmatprep.subr.bf16.mxu0 0
    %843 = vmatpush1.bf16.msra.mxu0 %v628
    %844 = vmatprep.subr.bf16.mxu0 0
    %845 = vmatpush1.bf16.msra.mxu0 %v629
    %846 = vmatprep.subr.bf16.mxu0 0
    %847 = vmatpush1.bf16.msra.mxu0 %v630
    %848 = vmatprep.subr.bf16.mxu0 0
    %849 = vmatpush1.bf16.msra.mxu0 %v631
    %850 = vmatprep.subr.bf16.mxu0 0
    %851 = vmatpush1.bf16.msra.mxu0 %v632
    %852 = vmatprep.subr.bf16.mxu0 0
    %853 = vmatpush1.bf16.msra.mxu0 %v633
    %854 = vmatprep.subr.bf16.mxu0 0
    %855 = vmatpush1.bf16.msra.mxu0 %v634
    %856 = vmatprep.subr.bf16.mxu0 0
    %857 = vmatpush1.bf16.msra.mxu0 %v635
    %858 = vmatprep.mubr.bf16.mxu0 %v102
    %859 = vmatmul.mubr.bf16.gmra.mrb[0].mxu0 %v101
    %v860 = vpop.f32.mrb[0].mxu0
    %v861 = vadd.f32 %v821, %v860
    %v862 = vpop.f32.mrb[0].mxu0
    %v863 = vpop.f32.mrb[0].mxu0
    %v864 = vpop.f32.mrb[0].mxu0
    %865 = vdwg.mxu0
    %866 = vmatprep.subr.bf16.mxu0 0
    %867 = vmatpush1.bf16.msra.mxu0 %v636
    %868 = vmatprep.subr.bf16.mxu0 0
    %869 = vmatpush1.bf16.msra.mxu0 0
    %870 = vmatprep.subr.bf16.mxu0 0
    %871 = vmatpush1.bf16.msra.mxu0 0
    %872 = vmatprep.subr.bf16.mxu0 0
    %873 = vmatpush1.bf16.msra.mxu0 0
    %874 = vmatprep.subr.bf16.mxu0 0
    %875 = vmatpush1.bf16.msra.mxu0 0
    %876 = vmatprep.subr.bf16.mxu0 0
    %877 = vmatpush1.bf16.msra.mxu0 0
    %878 = vmatprep.subr.bf16.mxu0 0
    %879 = vmatpush1.bf16.msra.mxu0 0
    %880 = vmatprep.subr.bf16.mxu0 0
    %881 = vmatpush1.bf16.msra.mxu0 0
    %882 = vmatprep.subr.bf16.mxu0 0
    %883 = vmatpush1.bf16.msra.mxu0 0
    %884 = vmatprep.subr.bf16.mxu0 0
    %885 = vmatpush1.bf16.msra.mxu0 0
    %886 = vmatprep.subr.bf16.mxu0 0
    %887 = vmatpush1.bf16.msra.mxu0 0
    %888 = vmatprep.subr.bf16.mxu0 0
    %889 = vmatpush1.bf16.msra.mxu0 0
    %890 = vmatprep.subr.bf16.mxu0 0
    %891 = vmatpush1.bf16.msra.mxu0 0
    %892 = vmatprep.subr.bf16.mxu0 0
    %893 = vmatpush1.bf16.msra.mxu0 0
    %894 = vmatprep.subr.bf16.mxu0 0
    %895 = vmatpush1.bf16.msra.mxu0 0
    %896 = vmatprep.subr.bf16.mxu0 0
    %897 = vmatpush1.bf16.msra.mxu0 0
    %898 = vmatprep.mubr.bf16.mxu0 0
    %899 = vmatmul.mubr.bf16.gmra.mrb[0].mxu0 %v704
    %v900 = vpop.f32.mrb[0].mxu0
    %v901 = vadd.f32 %v861, %v900
    %v902 = vpop.f32.mrb[0].mxu0
    %v903 = vpop.f32.mrb[0].mxu0
    %v904 = vpop.f32.mrb[0].mxu0
    %905 = vdwg.mxu0
    %v906 = vxor.u32 %v901, 2147483648
    %v907 = vmul.f32 %v906, 1.442695
    %v908 = vpow.pop %v907
    %v909 = vadd.f32 %v908, 1.0
    %v910 = vrcp.pop %v909
    %v911 = vmul.f32 1.0, %v910
    %913 = vrot.lane.b32.xlu0 %v901, 32
    %v914 = vpop.permute.xlu0 %913
    %v916 = vmul.f32 %v911, %v914
    %918 = vrot.lane.b32.xlu0 %v916, 64
    %v919 = vpop.permute.xlu0 %918
    %v921 = vadd.f32 %v901, %v919
    %v922 = vtanh.pop %v921
    %v923 = vsub.f32 1.0, %v911
    %925 = vrot.lane.b32.xlu0 %v922, 96
    %v926 = vpop.permute.xlu0 %925
    %v928 = vmul.f32 %v923, %v926
    %929 = vrot.lane.b32.xlu0 %v38, 32
    %v930 = vpop.permute.xlu0 %929
    %v932 = vmul.f32 %v911, %v930
    %v933 = vadd.f32 %v928, %v932
    %v934 = vpack.c.bf16 %v933, %v933
    %v935 = vld [vmem:[%s4] sm:$0xf]
    %v936 = vld [vmem:[%s4 + $0x4] sm:$0xf]
    %v937 = vld [vmem:[%s4 + $0x8] sm:$0xf]
    %v938 = vld [vmem:[%s4 + $0xc] sm:$0xf]
    %v939 = vld [vmem:[%s5] sm:$0x1]
    %v941 = vlaneseq
    %v942 = vshrl.u32 %v941, 7
    %v943 = vsub.s32 0, %v942
    %v944 = vrot.slane %v939, %v943
    %947 = vrot.lane.b32.xlu0 %v934, 96
    %v948 = vpop.permute.xlu0 %947
    %v953 = vunpack.c.l.b16 %v935
    %v954 = vunpack.c.l.b16 %v936
    %v955 = vunpack.c.l.b16 %v937
    %v956 = vunpack.c.l.b16 %v938
    %v957 = vpack.c.b16 %v954, %v953
    %v958 = vpack.c.b16 %v956, %v955
    %v962 = vsel %vm238, %v948, 0
    %964 = vmatprep.subr.bf16.mxu0 0
    %965 = vmatpush1.bf16.msra.mxu0 %v957
    %966 = vmatprep.subr.bf16.mxu0 0
    %967 = vmatpush1.bf16.msra.mxu0 %v958
    %968 = vmatprep.subr.bf16.mxu0 0
    %969 = vmatpush1.bf16.msra.mxu0 0
    %970 = vmatprep.subr.bf16.mxu0 0
    %971 = vmatpush1.bf16.msra.mxu0 0
    %972 = vmatprep.subr.bf16.mxu0 0
    %973 = vmatpush1.bf16.msra.mxu0 0
    %974 = vmatprep.subr.bf16.mxu0 0
    %975 = vmatpush1.bf16.msra.mxu0 0
    %976 = vmatprep.subr.bf16.mxu0 0
    %977 = vmatpush1.bf16.msra.mxu0 0
    %978 = vmatprep.subr.bf16.mxu0 0
    %979 = vmatpush1.bf16.msra.mxu0 0
    %980 = vmatprep.subr.bf16.mxu0 0
    %981 = vmatpush1.bf16.msra.mxu0 0
    %982 = vmatprep.subr.bf16.mxu0 0
    %983 = vmatpush1.bf16.msra.mxu0 0
    %984 = vmatprep.subr.bf16.mxu0 0
    %985 = vmatpush1.bf16.msra.mxu0 0
    %986 = vmatprep.subr.bf16.mxu0 0
    %987 = vmatpush1.bf16.msra.mxu0 0
    %988 = vmatprep.subr.bf16.mxu0 0
    %989 = vmatpush1.bf16.msra.mxu0 0
    %990 = vmatprep.subr.bf16.mxu0 0
    %991 = vmatpush1.bf16.msra.mxu0 0
    %992 = vmatprep.subr.bf16.mxu0 0
    %993 = vmatpush1.bf16.msra.mxu0 0
    %994 = vmatprep.subr.bf16.mxu0 0
    %995 = vmatpush1.bf16.msra.mxu0 0
    %996 = vmatprep.mubr.bf16.mxu0 0
    %997 = vmatmul.mubr.bf16.gmra.mrb[0].mxu0 %v962
    %v998 = vpop.f32.mrb[0].mxu0
    %v999 = vadd.f32 %v944, %v998
    %v1000 = vpop.f32.mrb[0].mxu0
    %v1001 = vpop.f32.mrb[0].mxu0
    %v1002 = vpop.f32.mrb[0].mxu0
    %1003 = vdwg.mxu0
    %vm1004 = vcmask 254976
    %v1005 = vsel %vm1004, %v999, -inf
    %1006 = vmax.xlane.f32.xlu0 %v1005
    %v1007 = vpop.xlane.xlu0 %1006
    %v1008 = vsub.f32 %v999, %v1007
    %v1009 = vmul.f32 %v1008, 1.442695
    %v1010 = vpow.pop %v1009
    %v1011 = vsel %vm1004, %v1010, 0.0
    %1012 = vadd.xlane.f32.xlu0 %v1011
    %v1013 = vpop.xlane.xlu0 %1012
    %v1014 = vlog2.pop %v1013
    %v1015 = vmul.f32 %v1014, 0.6931472
    %v1016 = vadd.f32 %v1007, %v1015
    %v1017 = vsub.f32 %v999, %v1016
    %1018 = vst.msk [vmem:[%s6] sm:$0x3] %vm1004, %v1017
    %vm1019 = vcmask 517376
    %1020 = vst.msk [vmem:[%s6] sm:$0x3] %vm1019, %v933
    // Predicated region
    $region30: #{seq2seq_forward.1} parent=1 // pred_check
      _
    $region31: #{seq2seq_forward.1} parent=1 // pred_check_branch
      %1022 = sbr.rel (0) target = $region33
    $region32: #{seq2seq_forward.1} parent=1 // pred_region
      _
    $region33: #{seq2seq_forward.1} parent=1 // pred_fallthru
      _
    // Predicated region
    $region34: #{seq2seq_forward.1} parent=1 // pred_check
      _
    $region35: #{seq2seq_forward.1} parent=1 // pred_check_branch
      %1024 = sbr.rel (0) target = $region37
    $region36: #{seq2seq_forward.1} parent=1 // pred_region
      _
    $region37: #{seq2seq_forward.1} parent=1 // pred_fallthru
      _
    %1025 = vsyncpa [#allocation3], 1

</llo_original>
